<compile_context>
chip_gen: v7x
topology: tpu7x:2x2x1
jax: 0.10.0
libtpu: 0.0.40
codegen_flags: <defaults>
</compile_context>

<pallas_src>
import functools

import jax
import jax.numpy as jnp
from jax.experimental import pallas as pl
from jax.experimental.pallas import tpu as pltpu


def _round_up(x, m):
    return (x + m - 1) // m * m


def _cdiv(a, b):
    return -(-a // b)


# --------------------------------------------------------------------------
# Hardware probe: scoped-VMEM budget + megacore hint (generation aware).
# --------------------------------------------------------------------------
def _tpu_vmem_budget():
    """Returns (vmem_budget_bytes, prefer_two_i_tiles)."""
    try:
        cap = int(pltpu.get_tpu_info().vmem_capacity_bytes)
    except Exception:
        # Conservative fallback that is safe on every generation.
        return 40 << 20, False
    if cap <= (64 << 20):
        # v7x-class: 64 MiB VMEM per TensorCore, 2 TCs/chip -> keep headroom
        # and shard the M axis across both cores.
        return max(cap - (16 << 20), 24 << 20), True
    # v5e / v6e: 128 MiB physical VMEM, single TensorCore.
    return min(cap - (24 << 20), 96 << 20), False


# --------------------------------------------------------------------------
# Tile selection.
# --------------------------------------------------------------------------
def _choose_tk(d, tk_max=1024):
    """Largest lane-dense K tile; prefer an exact divisor of D (no D padding)."""
    if d % 128 == 0:
        tk = 128
        for cand in range(256, min(tk_max, d) + 1, 128):
            if d % cand == 0:
                tk = cand
        return tk, d
    tk = min(tk_max, _round_up(d, 128))
    return tk, _round_up(d, tk)


def _choose_m_tiles(n, tk, h_pad, out_bytes, vmem_budget, min_i_tiles, tm_max):
    """Pick (tm, n_pad, num_i): fewest i-tiles that fit the VMEM budget."""
    grain = 16                                  # sublane grain (bf16 packing)
    n_base = _round_up(max(int(n), 1), grain)
    min_i = min_i_tiles if n_base >= min_i_tiles * grain else 1
    num_i = max(min_i, _cdiv(n_base, tm_max))
    while True:
        tm = _round_up(_cdiv(n_base, num_i), grain)
        usage = (2 * tm * tk * 2                # x tile (bf16, double-buffered)
                 + 2 * tk * h_pad * 2           # W1 K-tile (bf16, double-buffered)
                 + 2 * h_pad * h_pad * 2        # W2 (constant block, 2 buffers)
                 + 4 * h_pad * 4                # b1 / b2
                 + 2 * tm * h_pad * out_bytes   # output block (double-buffered)
                 + tm * h_pad * 4)              # f32 accumulator scratch
        if usage <= vmem_budget or tm <= grain:
            break
        num_i += 1
    return tm, tm * num_i, num_i


# --------------------------------------------------------------------------
# Pallas kernel: fused 2-layer MLP head
#   out = relu( relu(x @ W1 + b1) @ W2 + b2 )
# grid = (num_i, num_k), K innermost ("arbitrary"); M axis "parallel".
# --------------------------------------------------------------------------
def _mlp_head_kernel(x_ref, w1_ref, b1_ref, w2_ref, b2_ref, o_ref, acc_ref):
    k = pl.program_id(1)

    @pl.when(k == 0)
    def _init():
        # Fold the fc1 bias into the accumulator init.
        acc_ref[...] = jnp.broadcast_to(b1_ref[...], acc_ref.shape)

    # fc1 partial product for this K tile (bf16 inputs, f32 accumulation).
    acc_ref[...] += jnp.dot(x_ref[...], w1_ref[...],
                            preferred_element_type=jnp.float32)

    @pl.when(k == pl.num_programs(1) - 1)
    def _epilogue():
        h = jnp.maximum(acc_ref[...], 0.0).astype(w2_ref.dtype)   # bf16 for MXU
        o = jnp.dot(h, w2_ref[...], preferred_element_type=jnp.float32)
        o = jnp.maximum(o + b2_ref[...], 0.0)
        o_ref[...] = o.astype(o_ref.dtype)


def mlp_head(x_flat, w1p, b1p, w2p, b2p, *, hidden_dim, tk, d_pad,
             vmem_budget=40 << 20, min_i_tiles=1, tm_max=1024,
             out_dtype=jnp.float32):
    """x_flat: (N, D); padded weights: w1p (d_pad, h_pad) bf16, b1p/b2p (1, h_pad)
    f32, w2p (h_pad, h_pad) bf16.  Returns (N, hidden_dim) in out_dtype."""
    n, d = x_flat.shape
    h_pad = w1p.shape[1]
    out_bytes = jnp.dtype(out_dtype).itemsize

    tm, n_pad, num_i = _choose_m_tiles(n, tk, h_pad, out_bytes,
                                       vmem_budget, min_i_tiles, tm_max)

    # Only pad what is actually needed (weights were padded once at init).
    xp = x_flat.astype(jnp.bfloat16)
    if n_pad != n or d_pad != d:
        xp = jnp.pad(xp, ((0, n_pad - n), (0, d_pad - d)))

    num_k = d_pad // tk
    grid = (num_i, num_k)

    cost = pl.CostEstimate(
        flops=2 * n_pad * d_pad * h_pad + 2 * n_pad * h_pad * h_pad,
        transcendentals=0,
        bytes_accessed=(n_pad * d_pad * 2            # x (bf16)
                        + num_i * d_pad * h_pad * 2  # W1 streamed once per i-tile
                        + h_pad * h_pad * 2          # W2 (constant block, once)
                        + n_pad * h_pad * out_bytes),
    )

    out = pl.pallas_call(
        _mlp_head_kernel,
        out_shape=jax.ShapeDtypeStruct((n_pad, h_pad), out_dtype),
        grid_spec=pltpu.PrefetchScalarGridSpec(
            num_scalar_prefetch=0,
            grid=grid,
            in_specs=[
                pl.BlockSpec((tm, tk), lambda i, k: (i, k)),        # x tile
                pl.BlockSpec((tk, h_pad), lambda i, k: (k, 0)),     # W1 K-tile
                pl.BlockSpec((1, h_pad), lambda i, k: (0, 0)),      # b1
                pl.BlockSpec((h_pad, h_pad), lambda i, k: (0, 0)),  # W2
                pl.BlockSpec((1, h_pad), lambda i, k: (0, 0)),      # b2
            ],
            out_specs=pl.BlockSpec((tm, h_pad), lambda i, k: (i, 0)),
            scratch_shapes=[pltpu.VMEM((tm, h_pad), jnp.float32)],
        ),
        compiler_params=pltpu.CompilerParams(
            dimension_semantics=("parallel", "arbitrary"),
            vmem_limit_bytes=int(max(vmem_budget, 32 << 20)),
        ),
        cost_estimate=cost,
    )(xp, w1p, b1p, w2p, b2p)

    return out[:n, :hidden_dim]


# --------------------------------------------------------------------------
# roi_xform (ROI-Align-like, single bilinear sample per bin) -- plain JAX glue.
# Channels-last gather so each corner read is a contiguous C-vector.
# Emits bf16 (R, R, C) per ROI: no per-ROI transpose, no per-call cast later
# (the fc1 rows are permuted once at init to match this flatten order).
# --------------------------------------------------------------------------
def roi_xform_func(x, rpn_ret, part_rois, blob_rois, method, resolution,
                   spatial_scale, sampling_ratio):
    # TODO(synk): exact Detectron RoIAlign (sampling_ratio grid, half-pixel
    # offset) and a Pallas scalar-prefetch DMA-gather kernel for the bin reads
    # are not implemented; this is a single-sample bilinear pool.
    del method, sampling_ratio
    feat = x[1]                                  # (B, C, Hf, Wf), NCHW
    rois = rpn_ret[blob_rois]
    if part_rois is not None:
        rois = jnp.concatenate([rois, part_rois], axis=0)

    feat_nhwc = jnp.transpose(feat, (0, 2, 3, 1))  # (B, Hf, Wf, C), one pass
    _, hf, wf, _ = feat_nhwc.shape
    r = resolution

    def pool_one(roi):
        b = roi[0].astype(jnp.int32)
        x1 = roi[1] * spatial_scale
        y1 = roi[2] * spatial_scale
        x2 = roi[3] * spatial_scale
        y2 = roi[4] * spatial_scale
        bin_w = (x2 - x1) / r
        bin_h = (y2 - y1) / r
        xs = x1 + (jnp.arange(r, dtype=jnp.float32) + 0.5) * bin_w
        ys = y1 + (jnp.arange(r, dtype=jnp.float32) + 0.5) * bin_h
        xx = jnp.broadcast_to(xs[None, :], (r, r))
        yy = jnp.broadcast_to(ys[:, None], (r, r))

        x0 = jnp.floor(xx)
        y0 = jnp.floor(yy)
        wx = (xx - x0)[..., None]
        wy = (yy - y0)[..., None]
        x0i = jnp.clip(x0.astype(jnp.int32), 0, wf - 1)
        x1i = jnp.clip(x0i + 1, 0, wf - 1)
        y0i = jnp.clip(y0.astype(jnp.int32), 0, hf - 1)
        y1i = jnp.clip(y0i + 1, 0, hf - 1)

        fmap = jax.lax.dynamic_index_in_dim(feat_nhwc, b, axis=0,
                                            keepdims=False)   # (Hf, Wf, C)
        v00 = fmap[y0i, x0i]    # (R, R, C): contiguous channel vectors
        v01 = fmap[y0i, x1i]
        v10 = fmap[y1i, x0i]
        v11 = fmap[y1i, x1i]
        top = v00 * (1.0 - wx) + v01 * wx
        bot = v10 * (1.0 - wx) + v11 * wx
        return top * (1.0 - wy) + bot * wy       # (R, R, C), channels-last

    pooled = jax.vmap(pool_one)(rois)            # (N, R, R, C)
    return pooled.astype(jnp.bfloat16)           # MXU-native, saves HBM traffic


# --------------------------------------------------------------------------
# The module (weights initialized deterministically in-script).
# --------------------------------------------------------------------------
class RoI2MLPHead:
    def __init__(self, dim_in, roi_xform, spatial_scale, hidden_dim, roi_size,
                 key, out_dtype=jnp.float32):
        self.dim_in = dim_in
        self.roi_xform = roi_xform
        self.spatial_scale = spatial_scale
        self.hidden_dim = hidden_dim
        self.roi_size = roi_size
        self.out_dtype = out_dtype   # set to jnp.bfloat16 if downstream tolerates

        d = dim_in * roi_size ** 2
        h = hidden_dim
        k1, k2 = jax.random.split(key)
        # XavierFill (Caffe2): uniform(-sqrt(3/fan_in), sqrt(3/fan_in)); bias 0.
        s1 = (3.0 / d) ** 0.5
        s2 = (3.0 / h) ** 0.5
        # fc1 weight stored transposed (D, H); rows initially in Detectron's
        # (C, R, R) flatten order (matches fc6_w weight mapping) ...
        w1_crr = jax.random.uniform(k1, (d, h), jnp.float32, -s1, s1)
        # ... then permuted ONCE so the rows match the channels-last (R, R, C)
        # flatten that roi_xform emits.  Pure row permutation -> exact math,
        # removes the per-ROI (C,R,R) transpose from the hot path.
        perm = jnp.arange(d).reshape(dim_in, roi_size, roi_size)
        perm = jnp.transpose(perm, (1, 2, 0)).reshape(-1)
        self.w1 = w1_crr[perm]                       # (D, H), (R,R,C)-row order
        self.b1 = jnp.zeros((1, h), jnp.float32)
        self.w2 = jax.random.uniform(k2, (h, h), jnp.float32, -s2, s2)
        self.b2 = jnp.zeros((1, h), jnp.float32)

        # ---- hoisted weight prep: pad + bf16 cast once, not per forward ----
        self.h_pad = _round_up(h, 128)
        self.tk, self.d_pad = _choose_tk(d)
        self.w1p = (jnp.zeros((self.d_pad, self.h_pad), jnp.bfloat16)
                    .at[:d, :h].set(self.w1.astype(jnp.bfloat16)))
        self.b1p = jnp.zeros((1, self.h_pad), jnp.float32).at[:, :h].set(self.b1)
        self.w2p = (jnp.zeros((self.h_pad, self.h_pad), jnp.bfloat16)
                    .at[:h, :h].set(self.w2.astype(jnp.bfloat16)))
        self.b2p = jnp.zeros((1, self.h_pad), jnp.float32).at[:, :h].set(self.b2)

        # Generation-aware VMEM budget + 2-TensorCore hint (v7x).
        self.vmem_budget, self._two_cores = _tpu_vmem_budget()

    @functools.partial(jax.jit, static_argnums=0)
    def forward(self, x, rpn_ret, part_rois):
        batch = x[1].shape[0]
        pooled = self.roi_xform(
            x, rpn_ret, part_rois, blob_rois='rois', method='RoIAlign',
            resolution=self.roi_size, spatial_scale=self.spatial_scale,
            sampling_ratio=1)                      # (N, R, R, C) bf16
        batch_size = pooled.shape[0]
        # TODO(synk): cfg.USE_CONTEXT_RELA / USE_INNER_CONTEXT_RELA branches
        # omitted -- config defaults to False in this synthetic setup.
        x_flat = pooled.reshape(batch_size, -1)    # (N, D), (R,R,C)-major
        feat = mlp_head(
            x_flat, self.w1p, self.b1p, self.w2p, self.b2p,
            hidden_dim=self.hidden_dim, tk=self.tk, d_pad=self.d_pad,
            vmem_budget=self.vmem_budget,
            min_i_tiles=2 if self._two_cores else 1,
            out_dtype=self.out_dtype)              # (N, H)
        if part_rois is not None:
            n_part = 5 * batch
            box_feat = feat[:-n_part]
            part_feat = feat[-n_part:]
            part_feat = part_feat.reshape(part_feat.shape[0],
                                          part_feat.shape[1], 1, 1)
        else:
            box_feat = feat
            part_feat = None
        box_feat = box_feat.reshape(box_feat.shape[0], box_feat.shape[1], 1, 1)
        return box_feat, part_feat


# --------------------------------------------------------------------------
if __name__ == "__main__":
    key = jax.random.PRNGKey(0)
    k_feat, k_roi, k_proi, k_w = jax.random.split(key, 4)

    # Small, module-consistent shapes.
    batch, dim_in, hf, wf = 2, 4, 16, 16       # feature map NCHW
    roi_size = 4                               # cfg.FAST_RCNN.ROI_XFORM_RESOLUTION
    hidden_dim = 32                            # cfg.FAST_RCNN.MLP_HEAD_DIM
    spatial_scale = 0.25
    num_box_rois = 6
    num_part_rois = 5 * batch                  # forward slices off 5*batch rows

    feat = jax.random.normal(k_feat, (batch, dim_in, hf, wf), jnp.float32)
    x = (feat, feat)                           # forward uses x[1].shape[0]

    def make_rois(k, n):
        kb, kc = jax.random.split(k)
        bidx = jax.random.randint(kb, (n, 1), 0, batch).astype(jnp.float32)
        c = jax.random.uniform(kc, (n, 4), jnp.float32, 0.0, 60.0)
        x1 = jnp.minimum(c[:, 0], c[:, 2])[:, None]
        x2 = jnp.maximum(c[:, 0], c[:, 2])[:, None] + 4.0
        y1 = jnp.minimum(c[:, 1], c[:, 3])[:, None]
        y2 = jnp.maximum(c[:, 1], c[:, 3])[:, None] + 4.0
        return jnp.concatenate([bidx, x1, y1, x2, y2], axis=1)

    rpn_ret = {"rois": make_rois(k_roi, num_box_rois)}
    part_rois = make_rois(k_proi, num_part_rois)

    head = RoI2MLPHead(dim_in, roi_xform_func, spatial_scale,
                       hidden_dim, roi_size, k_w)

    box_feat, part_feat = head.forward(x, rpn_ret, part_rois)
    jax.block_until_ready(box_feat)
    jax.block_until_ready(part_feat)

    assert box_feat.shape == (num_box_rois, hidden_dim, 1, 1)
    assert part_feat.shape == (num_part_rois, hidden_dim, 1, 1)
    assert bool(jnp.all(jnp.isfinite(box_feat))) and bool(jnp.all(box_feat >= 0))

    # Pure-JAX f32 reference for the fused MLP (explicit bf16 tolerance).
    pooled_ref = roi_xform_func(x, rpn_ret, part_rois, blob_rois='rois',
                                method='RoIAlign', resolution=roi_size,
                                spatial_scale=spatial_scale, sampling_ratio=1)
    x_flat_ref = pooled_ref.reshape(pooled_ref.shape[0], -1).astype(jnp.float32)
    ref = jnp.maximum(x_flat_ref @ head.w1 + head.b1, 0.0)
    ref = jnp.maximum(ref @ head.w2 + head.b2, 0.0)
    got = jnp.concatenate([box_feat[:, :, 0, 0], part_feat[:, :, 0, 0]], axis=0)
    err = float(jnp.max(jnp.abs(got.astype(jnp.float32) - ref)))
    scale = float(jnp.max(jnp.abs(ref))) + 1e-6
    assert err / scale < 5e-2, f"MLP mismatch: rel err {err / scale:.4f}"

    print("KERNEL_OK")
</pallas_src>

<mosaic_0001>
module attributes {stable_mosaic.version = 11 : i64} {
  func.func @_mlp_head_kernel(%arg0: i32, %arg1: i32, %arg2: memref<16x128xbf16, #tpu.memory_space<vmem>>, %arg3: memref<128x128xbf16, #tpu.memory_space<vmem>>, %arg4: memref<1x128xf32, #tpu.memory_space<vmem>>, %arg5: memref<128x128xbf16, #tpu.memory_space<vmem>>, %arg6: memref<1x128xf32, #tpu.memory_space<vmem>>, %arg7: memref<16x128xf32, #tpu.memory_space<vmem>>, %arg8: memref<16x128xf32, #tpu.memory_space<vmem>>) attributes {dimension_semantics = [#tpu.dimension_semantics<parallel>, #tpu.dimension_semantics<arbitrary>], iteration_bounds = array<i64: 1, 1>, scalar_prefetch = 0 : i64, scratch_operands = 1 : i64, tpu.core_type = #tpu.core_type<tc>, window_params = [{transform_indices = @transform_0, window_bounds = array<i64: 16, 128>}, {transform_indices = @transform_1, window_bounds = array<i64: 128, 128>}, {pipeline_mode = #tpu.pipeline_mode<synchronous>, transform_indices = @transform_2, window_bounds = array<i64: 1, 128>}, {pipeline_mode = #tpu.pipeline_mode<synchronous>, transform_indices = @transform_3, window_bounds = array<i64: 128, 128>}, {pipeline_mode = #tpu.pipeline_mode<synchronous>, transform_indices = @transform_4, window_bounds = array<i64: 1, 128>}, {transform_indices = @transform_5, window_bounds = array<i64: 16, 128>}]} {
    %c0_i32 = arith.constant 0 : i32
    %0 = arith.cmpi eq, %arg1, %c0_i32 : i32
    %1 = arith.extui %0 : i1 to i32
    %c0_i32_0 = arith.constant 0 : i32
    %2 = arith.cmpi ne, %1, %c0_i32_0 : i32
    scf.if %2 {
      %c0_10 = arith.constant 0 : index
      %c0_11 = arith.constant 0 : index
      %12 = vector.load %arg4[%c0_10, %c0_11] : memref<1x128xf32, #tpu.memory_space<vmem>>, vector<1x128xf32>
      %13 = vector.shape_cast %12 : vector<1x128xf32> to vector<1x128xf32>
      %14 = vector.broadcast %13 : vector<1x128xf32> to vector<16x128xf32>
      %c0_12 = arith.constant 0 : index
      %c0_13 = arith.constant 0 : index
      %15 = vector.load %arg8[%c0_12, %c0_13] : memref<16x128xf32, #tpu.memory_space<vmem>>, vector<16x128xf32>
      tpu.vector_store %arg8[%c0_12, %c0_13], %14 {strides = array<i32>} : memref<16x128xf32, #tpu.memory_space<vmem>>, vector<16x128xf32>,
    } else {
    }
    %c0 = arith.constant 0 : index
    %c0_1 = arith.constant 0 : index
    %3 = vector.load %arg8[%c0, %c0_1] : memref<16x128xf32, #tpu.memory_space<vmem>>, vector<16x128xf32>
    %c0_2 = arith.constant 0 : index
    %c0_3 = arith.constant 0 : index
    %4 = vector.load %arg2[%c0_2, %c0_3] : memref<16x128xbf16, #tpu.memory_space<vmem>>, vector<16x128xbf16>
    %c0_4 = arith.constant 0 : index
    %c0_5 = arith.constant 0 : index
    %5 = vector.load %arg3[%c0_4, %c0_5] : memref<128x128xbf16, #tpu.memory_space<vmem>>, vector<128x128xbf16>
    %cst = arith.constant dense<0.000000e+00> : vector<16x128xf32>
    %6 = tpu.matmul %4, %5, %cst {dimension_numbers = #tpu.dot_dimension_numbers<[1], [0], [0], [1], [0, 0, 1, 1], [], []>} : vector<16x128xbf16>, vector<128x128xbf16>, vector<16x128xf32> -> vector<16x128xf32>
    %7 = arith.addf %3, %6 : vector<16x128xf32>
    %c0_6 = arith.constant 0 : index
    %c0_7 = arith.constant 0 : index
    %8 = vector.load %arg8[%c0_6, %c0_7] : memref<16x128xf32, #tpu.memory_space<vmem>>, vector<16x128xf32>
    tpu.vector_store %arg8[%c0_6, %c0_7], %7 {strides = array<i32>} : memref<16x128xf32, #tpu.memory_space<vmem>>, vector<16x128xf32>,
    %c0_i32_8 = arith.constant 0 : i32
    %9 = arith.cmpi eq, %arg1, %c0_i32_8 : i32
    %10 = arith.extui %9 : i1 to i32
    %c0_i32_9 = arith.constant 0 : i32
    %11 = arith.cmpi ne, %10, %c0_i32_9 : i32
    scf.if %11 {
      %c0_10 = arith.constant 0 : index
      %c0_11 = arith.constant 0 : index
      %12 = vector.load %arg8[%c0_10, %c0_11] : memref<16x128xf32, #tpu.memory_space<vmem>>, vector<16x128xf32>
      %cst_12 = arith.constant 0.000000e+00 : f32
      %13 = vector.broadcast %cst_12 : f32 to vector<16x128xf32>
      %14 = arith.maximumf %12, %13 : vector<16x128xf32>
      %15 = arith.truncf %14 : vector<16x128xf32> to vector<16x128xbf16>
      %c0_13 = arith.constant 0 : index
      %c0_14 = arith.constant 0 : index
      %16 = vector.load %arg5[%c0_13, %c0_14] : memref<128x128xbf16, #tpu.memory_space<vmem>>, vector<128x128xbf16>
      %cst_15 = arith.constant dense<0.000000e+00> : vector<16x128xf32>
      %17 = tpu.matmul %15, %16, %cst_15 {dimension_numbers = #tpu.dot_dimension_numbers<[1], [0], [0], [1], [0, 0, 1, 1], [], []>} : vector<16x128xbf16>, vector<128x128xbf16>, vector<16x128xf32> -> vector<16x128xf32>
      %c0_16 = arith.constant 0 : index
      %c0_17 = arith.constant 0 : index
      %18 = vector.load %arg6[%c0_16, %c0_17] : memref<1x128xf32, #tpu.memory_space<vmem>>, vector<1x128xf32>
      %19 = vector.broadcast %18 : vector<1x128xf32> to vector<16x128xf32>
      %20 = arith.addf %17, %19 : vector<16x128xf32>
      %cst_18 = arith.constant 0.000000e+00 : f32
      %21 = vector.broadcast %cst_18 : f32 to vector<16x128xf32>
      %22 = arith.maximumf %20, %21 : vector<16x128xf32>
      %c0_19 = arith.constant 0 : index
      %c0_20 = arith.constant 0 : index
      %23 = vector.load %arg7[%c0_19, %c0_20] : memref<16x128xf32, #tpu.memory_space<vmem>>, vector<16x128xf32>
      tpu.vector_store %arg7[%c0_19, %c0_20], %22 {strides = array<i32>} : memref<16x128xf32, #tpu.memory_space<vmem>>, vector<16x128xf32>,
    } else {
    }
    return
  }
  func.func @transform_0(%arg0: i32, %arg1: i32) -> (i32, i32) {
    %c0_i32 = arith.constant 0 : i32
    return %arg0, %arg1 : i32, i32
  }
  func.func @transform_1(%arg0: i32, %arg1: i32) -> (i32, i32) {
    %c0_i32 = arith.constant 0 : i32
    %c0_i32_0 = arith.constant 0 : i32
    return %arg1, %c0_i32 : i32, i32
  }
  func.func @transform_2(%arg0: i32, %arg1: i32) -> (i32, i32) {
    %c0_i32 = arith.constant 0 : i32
    %c0_i32_0 = arith.constant 0 : i32
    %c0_i32_1 = arith.constant 0 : i32
    return %c0_i32, %c0_i32_0 : i32, i32
  }
  func.func @transform_3(%arg0: i32, %arg1: i32) -> (i32, i32) {
    %c0_i32 = arith.constant 0 : i32
    %c0_i32_0 = arith.constant 0 : i32
    %c0_i32_1 = arith.constant 0 : i32
    return %c0_i32, %c0_i32_0 : i32, i32
  }
  func.func @transform_4(%arg0: i32, %arg1: i32) -> (i32, i32) {
    %c0_i32 = arith.constant 0 : i32
    %c0_i32_0 = arith.constant 0 : i32
    %c0_i32_1 = arith.constant 0 : i32
    return %c0_i32, %c0_i32_0 : i32, i32
  }
  func.func @transform_5(%arg0: i32, %arg1: i32) -> (i32, i32) {
    %c0_i32 = arith.constant 0 : i32
    %c0_i32_0 = arith.constant 0 : i32
    return %arg0, %c0_i32 : i32, i32
  }
}

</mosaic_0001>

<llo_original>
// kernel: forward.1
$region0: #{forward.1}
  #allocation0 [shape = 'u32[]', space=smem, size = 0x4, offset = 0x4, fixed_abs, tag = 'smem constant byte address 0x4 - core index']
  #allocation1 [shape = 'u32[144,128]{1,0:T(1,128)}', space=vmem, size = 0x12000, scoped, tag = 'internal scratch']
  #allocation2 [shape = 'f32[16,128]{1,0:T(8,128)}', space=vmem, size = 0x2000, scoped, tag = 'scratch operand']
  %s0 = inlined_call_operand.vmem [shape: bf16[16,128], index: 0, kind: input, shape index: {}]
  %s1 = inlined_call_operand.vmem [shape: bf16[128,128], index: 1, kind: input, shape index: {}]
  %s2 = inlined_call_operand.vmem [shape: f32[1,128], index: 2, kind: input, shape index: {}, may-alias: {2,4}]
  %s3 = inlined_call_operand.vmem [shape: bf16[128,128], index: 3, kind: input, shape index: {}]
  %s4 = inlined_call_operand.vmem [shape: f32[1,128], index: 4, kind: input, shape index: {}, may-alias: {2,4}]
  %s5 = inlined_call_operand.vmem [shape: f32[16,128], index: 5, kind: output, shape index: {}]
  %s6 = sld [smem:[#allocation0]]
  $region38: #{forward.1} parent=0
    _
  %s8 = ssub.s32 1, %s6
  %s9 = scalar_select 0, %s8, %s6
  // Predicated region
  $region2: #{forward.1} parent=0 // pred_check
    _
  $region3: #{forward.1} parent=0 // pred_check_branch
    %11 = sbr.rel (0) target = $region5
  $region4: #{forward.1} parent=0 // pred_region
    _
  $region5: #{forward.1} parent=0 // pred_fallthru
    _
  // Predicated region
  $region6: #{forward.1} parent=0 // pred_check
    _
  $region7: #{forward.1} parent=0 // pred_check_branch
    %13 = sbr.rel (0) target = $region9
  $region8: #{forward.1} parent=0 // pred_region
    _
  $region9: #{forward.1} parent=0 // pred_fallthru
    _
  // Predicated region
  $region10: #{forward.1} parent=0 // pred_check
    _
  $region11: #{forward.1} parent=0 // pred_check_branch
    %15 = sbr.rel (0) target = $region13
  $region12: #{forward.1} parent=0 // pred_region
    _
  $region13: #{forward.1} parent=0 // pred_fallthru
    _
  // Predicated region
  $region14: #{forward.1} parent=0 // pred_check
    _
  $region15: #{forward.1} parent=0 // pred_check_branch
    %17 = sbr.rel (0) target = $region17
  $region16: #{forward.1} parent=0 // pred_region
    _
  $region17: #{forward.1} parent=0 // pred_fallthru
    _
  // Predicated region
  $region18: #{forward.1} parent=0 // pred_check
    _
  $region19: #{forward.1} parent=0 // pred_check_branch
    %19 = sbr.rel (0) target = $region21
  $region20: #{forward.1} parent=0 // pred_region
    _
  $region21: #{forward.1} parent=0 // pred_fallthru
    _
  %p21 = scmp.eq.s32.totalorder 0, 0
  // Predicated region
  $region22: #{forward.1} parent=0 // pred_check
    %p22 = pneg %p21
  $region23: #{forward.1} parent=0 // pred_check_branch
    %24 = sbr.rel (%p22) target = $region25
  $region24: #{forward.1} parent=0 // pred_region
    %v25 = vld [vmem:[%s2] sm:$0x1]
    %v27 = vlaneseq
    %v28 = vshrl.u32 %v27, 7
    %v29 = vsub.s32 0, %v28
    %v30 = vrot.slane %v25, %v29
    %32 = vst [vmem:[#allocation2] sm:$0xff] %v30
    %33 = vst [vmem:[#allocation2 + $0x8] sm:$0xff] %v30
  $region25: #{forward.1} parent=0 // pred_fallthru
    _
  %v34 = vld [vmem:[#allocation2] sm:$0xff]
  %v35 = vld [vmem:[#allocation2 + $0x8] sm:$0xff]
  %v36 = vld [vmem:[%s0] sm:$0xf]
  %v37 = vld [vmem:[%s0 + $0x4] sm:$0xf]
  %v38 = vld [vmem:[%s1] sm:$0xf]
  %v39 = vld [vmem:[%s1 + $0x4] sm:$0xf]
  %v40 = vld [vmem:[%s1 + $0x8] sm:$0xf]
  %v41 = vld [vmem:[%s1 + $0xc] sm:$0xf]
  %v42 = vld [vmem:[%s1 + $0x10] sm:$0xf]
  %v43 = vld [vmem:[%s1 + $0x14] sm:$0xf]
  %v44 = vld [vmem:[%s1 + $0x18] sm:$0xf]
  %v45 = vld [vmem:[%s1 + $0x1c] sm:$0xf]
  %v46 = vld [vmem:[%s1 + $0x20] sm:$0xf]
  %v47 = vld [vmem:[%s1 + $0x24] sm:$0xf]
  %v48 = vld [vmem:[%s1 + $0x28] sm:$0xf]
  %v49 = vld [vmem:[%s1 + $0x2c] sm:$0xf]
  %v50 = vld [vmem:[%s1 + $0x30] sm:$0xf]
  %v51 = vld [vmem:[%s1 + $0x34] sm:$0xf]
  %v52 = vld [vmem:[%s1 + $0x38] sm:$0xf]
  %v53 = vld [vmem:[%s1 + $0x3c] sm:$0xf]
  %v56 = vunpack.c.l.b16 %v36
  %v57 = vunpack.c.l.b16 %v37
  %v58 = vpack.c.b16 %v57, %v56
  %v76 = vunpack.c.l.b16 %v38
  %v77 = vunpack.c.l.b16 %v39
  %v78 = vunpack.c.l.b16 %v40
  %v79 = vunpack.c.l.b16 %v41
  %v80 = vunpack.c.l.b16 %v42
  %v81 = vunpack.c.l.b16 %v43
  %v82 = vunpack.c.l.b16 %v44
  %v83 = vunpack.c.l.b16 %v45
  %v84 = vunpack.c.l.b16 %v46
  %v85 = vunpack.c.l.b16 %v47
  %v86 = vunpack.c.l.b16 %v48
  %v87 = vunpack.c.l.b16 %v49
  %v88 = vunpack.c.l.b16 %v50
  %v89 = vunpack.c.l.b16 %v51
  %v90 = vunpack.c.l.b16 %v52
  %v91 = vunpack.c.l.b16 %v53
  %v92 = vpack.c.b16 %v77, %v76
  %v93 = vpack.c.b16 %v79, %v78
  %v94 = vpack.c.b16 %v81, %v80
  %v95 = vpack.c.b16 %v83, %v82
  %v96 = vpack.c.b16 %v85, %v84
  %v97 = vpack.c.b16 %v87, %v86
  %v98 = vpack.c.b16 %v89, %v88
  %v99 = vpack.c.b16 %v91, %v90
  %108 = vmatprep.subr.bf16.mxu0 0
  %109 = vmatpush1.bf16.msra.mxu0 %v92
  %110 = vmatprep.subr.bf16.mxu0 0
  %111 = vmatpush1.bf16.msra.mxu0 %v93
  %112 = vmatprep.subr.bf16.mxu0 0
  %113 = vmatpush1.bf16.msra.mxu0 %v94
  %114 = vmatprep.subr.bf16.mxu0 0
  %115 = vmatpush1.bf16.msra.mxu0 %v95
  %116 = vmatprep.subr.bf16.mxu0 0
  %117 = vmatpush1.bf16.msra.mxu0 %v96
  %118 = vmatprep.subr.bf16.mxu0 0
  %119 = vmatpush1.bf16.msra.mxu0 %v97
  %120 = vmatprep.subr.bf16.mxu0 0
  %121 = vmatpush1.bf16.msra.mxu0 %v98
  %122 = vmatprep.subr.bf16.mxu0 0
  %123 = vmatpush1.bf16.msra.mxu0 %v99
  %124 = vmatprep.subr.bf16.mxu0 0
  %125 = vmatpush1.bf16.msra.mxu0 0
  %126 = vmatprep.subr.bf16.mxu0 0
  %127 = vmatpush1.bf16.msra.mxu0 0
  %128 = vmatprep.subr.bf16.mxu0 0
  %129 = vmatpush1.bf16.msra.mxu0 0
  %130 = vmatprep.subr.bf16.mxu0 0
  %131 = vmatpush1.bf16.msra.mxu0 0
  %132 = vmatprep.subr.bf16.mxu0 0
  %133 = vmatpush1.bf16.msra.mxu0 0
  %134 = vmatprep.subr.bf16.mxu0 0
  %135 = vmatpush1.bf16.msra.mxu0 0
  %136 = vmatprep.subr.bf16.mxu0 0
  %137 = vmatpush1.bf16.msra.mxu0 0
  %138 = vmatprep.subr.bf16.mxu0 0
  %139 = vmatpush1.bf16.msra.mxu0 0
  %140 = vmatprep.mubr.bf16.mxu0 0
  %141 = vmatmul.mubr.bf16.gmra.mrb[0].mxu0 %v58
  %v142 = vpop.f32.mrb[0].mxu0
  %v143 = vadd.f32 0.0, %v142
  %v144 = vpop.f32.mrb[0].mxu0
  %v145 = vpop.f32.mrb[0].mxu0
  %v146 = vadd.f32 0.0, %v145
  %v147 = vpop.f32.mrb[0].mxu0
  %148 = vdwg.mxu0
  %v149 = vadd.f32 %v34, %v143
  %v150 = vadd.f32 %v35, %v146
  %151 = vst [vmem:[#allocation2] sm:$0xff] %v149
  %152 = vst [vmem:[#allocation2 + $0x8] sm:$0xff] %v150
  // Predicated region
  $region26: #{forward.1} parent=0 // pred_check
    %p153 = pneg %p21
  $region27: #{forward.1} parent=0 // pred_check_branch
    %155 = sbr.rel (%p153) target = $region29
  $region28: #{forward.1} parent=0 // pred_region
    %v156 = vld [vmem:[#allocation2] sm:$0xff]
    %v157 = vld [vmem:[#allocation2 + $0x8] sm:$0xff]
    %v158 = vmax.f32 %v156, 0.0
    %v159 = vmax.f32 %v157, 0.0
    %v160 = vpack.c.bf16 %v159, %v158
    %v161 = vld [vmem:[%s3] sm:$0xf]
    %v162 = vld [vmem:[%s3 + $0x4] sm:$0xf]
    %v163 = vld [vmem:[%s3 + $0x8] sm:$0xf]
    %v164 = vld [vmem:[%s3 + $0xc] sm:$0xf]
    %v165 = vld [vmem:[%s3 + $0x10] sm:$0xf]
    %v166 = vld [vmem:[%s3 + $0x14] sm:$0xf]
    %v167 = vld [vmem:[%s3 + $0x18] sm:$0xf]
    %v168 = vld [vmem:[%s3 + $0x1c] sm:$0xf]
    %v169 = vld [vmem:[%s3 + $0x20] sm:$0xf]
    %v170 = vld [vmem:[%s3 + $0x24] sm:$0xf]
    %v171 = vld [vmem:[%s3 + $0x28] sm:$0xf]
    %v172 = vld [vmem:[%s3 + $0x2c] sm:$0xf]
    %v173 = vld [vmem:[%s3 + $0x30] sm:$0xf]
    %v174 = vld [vmem:[%s3 + $0x34] sm:$0xf]
    %v175 = vld [vmem:[%s3 + $0x38] sm:$0xf]
    %v176 = vld [vmem:[%s3 + $0x3c] sm:$0xf]
    %v177 = vld [vmem:[%s4] sm:$0x1]
    %v179 = vlaneseq
    %v180 = vshrl.u32 %v179, 7
    %v181 = vsub.s32 0, %v180
    %v182 = vrot.slane %v177, %v181
    %v200 = vunpack.c.l.b16 %v161
    %v201 = vunpack.c.l.b16 %v162
    %v202 = vunpack.c.l.b16 %v163
    %v203 = vunpack.c.l.b16 %v164
    %v204 = vunpack.c.l.b16 %v165
    %v205 = vunpack.c.l.b16 %v166
    %v206 = vunpack.c.l.b16 %v167
    %v207 = vunpack.c.l.b16 %v168
    %v208 = vunpack.c.l.b16 %v169
    %v209 = vunpack.c.l.b16 %v170
    %v210 = vunpack.c.l.b16 %v171
    %v211 = vunpack.c.l.b16 %v172
    %v212 = vunpack.c.l.b16 %v173
    %v213 = vunpack.c.l.b16 %v174
    %v214 = vunpack.c.l.b16 %v175
    %v215 = vunpack.c.l.b16 %v176
    %v216 = vpack.c.b16 %v201, %v200
    %v217 = vpack.c.b16 %v203, %v202
    %v218 = vpack.c.b16 %v205, %v204
    %v219 = vpack.c.b16 %v207, %v206
    %v220 = vpack.c.b16 %v209, %v208
    %v221 = vpack.c.b16 %v211, %v210
    %v222 = vpack.c.b16 %v213, %v212
    %v223 = vpack.c.b16 %v215, %v214
    %232 = vmatprep.subr.bf16.mxu0 0
    %233 = vmatpush1.bf16.msra.mxu0 %v216
    %234 = vmatprep.subr.bf16.mxu0 0
    %235 = vmatpush1.bf16.msra.mxu0 %v217
    %236 = vmatprep.subr.bf16.mxu0 0
    %237 = vmatpush1.bf16.msra.mxu0 %v218
    %238 = vmatprep.subr.bf16.mxu0 0
    %239 = vmatpush1.bf16.msra.mxu0 %v219
    %240 = vmatprep.subr.bf16.mxu0 0
    %241 = vmatpush1.bf16.msra.mxu0 %v220
    %242 = vmatprep.subr.bf16.mxu0 0
    %243 = vmatpush1.bf16.msra.mxu0 %v221
    %244 = vmatprep.subr.bf16.mxu0 0
    %245 = vmatpush1.bf16.msra.mxu0 %v222
    %246 = vmatprep.subr.bf16.mxu0 0
    %247 = vmatpush1.bf16.msra.mxu0 %v223
    %248 = vmatprep.subr.bf16.mxu0 0
    %249 = vmatpush1.bf16.msra.mxu0 0
    %250 = vmatprep.subr.bf16.mxu0 0
    %251 = vmatpush1.bf16.msra.mxu0 0
    %252 = vmatprep.subr.bf16.mxu0 0
    %253 = vmatpush1.bf16.msra.mxu0 0
    %254 = vmatprep.subr.bf16.mxu0 0
    %255 = vmatpush1.bf16.msra.mxu0 0
    %256 = vmatprep.subr.bf16.mxu0 0
    %257 = vmatpush1.bf16.msra.mxu0 0
    %258 = vmatprep.subr.bf16.mxu0 0
    %259 = vmatpush1.bf16.msra.mxu0 0
    %260 = vmatprep.subr.bf16.mxu0 0
    %261 = vmatpush1.bf16.msra.mxu0 0
    %262 = vmatprep.subr.bf16.mxu0 0
    %263 = vmatpush1.bf16.msra.mxu0 0
    %264 = vmatprep.mubr.bf16.mxu0 0
    %265 = vmatmul.mubr.bf16.gmra.mrb[0].mxu0 %v160
    %v266 = vpop.f32.mrb[0].mxu0
    %v267 = vadd.f32 %v182, %v266
    %v268 = vpop.f32.mrb[0].mxu0
    %v269 = vpop.f32.mrb[0].mxu0
    %v270 = vadd.f32 %v182, %v269
    %v271 = vpop.f32.mrb[0].mxu0
    %272 = vdwg.mxu0
    %v273 = vmax.f32 %v267, 0.0
    %v274 = vmax.f32 %v270, 0.0
    %275 = vst [vmem:[%s5] sm:$0xff] %v273
    %276 = vst [vmem:[%s5 + $0x8] sm:$0xff] %v274
  $region29: #{forward.1} parent=0 // pred_fallthru
    _
  // Predicated region
  $region30: #{forward.1} parent=0 // pred_check
    _
  $region31: #{forward.1} parent=0 // pred_check_branch
    %278 = sbr.rel (0) target = $region33
  $region32: #{forward.1} parent=0 // pred_region
    _
  $region33: #{forward.1} parent=0 // pred_fallthru
    _
  // Predicated region
  $region34: #{forward.1} parent=0 // pred_check
    _
  $region35: #{forward.1} parent=0 // pred_check_branch
    %280 = sbr.rel (0) target = $region37
  $region36: #{forward.1} parent=0 // pred_region
    _
  $region37: #{forward.1} parent=0 // pred_fallthru
    _

</llo_original>
